<compile_context>
chip_gen: v6e
topology: v6e:2x2x1
jax: 0.10.0
libtpu: 0.0.40
codegen_flags: <defaults>
</compile_context>

<pallas_src>
import functools

import jax
import jax.numpy as jnp
from jax.experimental import pallas as pl
from jax.experimental.pallas import tpu as pltpu


# ----------------------------------------------------------------------------
# helpers
# ----------------------------------------------------------------------------
def _pick_tile(full, target, multiple):
    """Largest t <= target dividing `full` and a multiple of `multiple`
    (falls back to the full dim, which is always a legal block)."""
    if full <= target:
        return full
    for t in range(min(target, full), 0, -1):
        if full % t == 0 and t % multiple == 0:
            return t
    return full


def _seq_tile(n, d, target_bytes=2 << 20):
    """Sequence tile sized so an f32 (TN, D) slab is ~2 MiB."""
    target = max(8, target_bytes // (d * 4))
    return _pick_tile(n, target, 8)


def _ln(v, eps=1e-6):
    """LayerNorm over the last dim, no affine, biased variance (PyTorch)."""
    m = jnp.mean(v, axis=-1, keepdims=True)
    c = v - m
    var = jnp.mean(c * c, axis=-1, keepdims=True)
    return c * jax.lax.rsqrt(var + eps)


def _cparams(*sems):
    return pltpu.CompilerParams(dimension_semantics=tuple(sems),
                                vmem_limit_bytes=40 * 1024 * 1024)


# ----------------------------------------------------------------------------
# Kernel 1: fused AdaLN modulate + QKV projections
#   x:(B,N,D), scale/shift:(B,1,D), wq/wk/wv:(D,D) pre-transposed, b*: (1,D)
#   -> q,k,v each (B,N,D)
# ----------------------------------------------------------------------------
def _adaln_qkv_kernel(x_ref, scale_ref, shift_ref, wq_ref, wk_ref, wv_ref,
                      bq_ref, bk_ref, bv_ref, q_ref, k_ref, v_ref):
    x = x_ref[0].astype(jnp.float32)                          # (TN, D)
    norm = (_ln(x) * (1.0 + scale_ref[0].astype(jnp.float32))
            + shift_ref[0].astype(jnp.float32))
    h = norm.astype(wq_ref.dtype)                             # MXU operand dtype
    q_ref[0] = (jnp.dot(h, wq_ref[...], preferred_element_type=jnp.float32)
                + bq_ref[...].astype(jnp.float32)).astype(q_ref.dtype)
    k_ref[0] = (jnp.dot(h, wk_ref[...], preferred_element_type=jnp.float32)
                + bk_ref[...].astype(jnp.float32)).astype(k_ref.dtype)
    v_ref[0] = (jnp.dot(h, wv_ref[...], preferred_element_type=jnp.float32)
                + bv_ref[...].astype(jnp.float32)).astype(v_ref.dtype)


def adaln_qkv(x, scale, shift, wq_t, wk_t, wv_t, bq, bk, bv):
    B, N, D = x.shape
    tn = _seq_tile(N, D)
    td = _pick_tile(D, 512, 128)                              # output-dim tile
    x_spec = pl.BlockSpec((1, tn, D), lambda b, n, o: (b, n, 0))
    ss_spec = pl.BlockSpec((1, 1, D), lambda b, n, o: (b, 0, 0))
    w_spec = pl.BlockSpec((D, td), lambda b, n, o: (0, o))
    b_spec = pl.BlockSpec((1, td), lambda b, n, o: (0, o))
    o_spec = pl.BlockSpec((1, tn, td), lambda b, n, o: (b, n, o))
    out_sds = jax.ShapeDtypeStruct((B, N, D), x.dtype)
    return pl.pallas_call(
        _adaln_qkv_kernel,
        out_shape=(out_sds, out_sds, out_sds),
        grid=(B, N // tn, D // td),
        in_specs=[x_spec, ss_spec, ss_spec, w_spec, w_spec, w_spec,
                  b_spec, b_spec, b_spec],
        out_specs=(o_spec, o_spec, o_spec),
        compiler_params=_cparams("parallel", "parallel", "parallel"),
    )(x, scale.reshape(B, 1, D), shift.reshape(B, 1, D),
      wq_t, wk_t, wv_t,
      bq.reshape(1, D), bk.reshape(1, D), bv.reshape(1, D))


# ----------------------------------------------------------------------------
# Kernel 2: flash attention, (B,N,D) layout, heads sliced in-kernel,
#           fused QK-LayerNorm, online softmax over KV tiles.
# ----------------------------------------------------------------------------
def _flash_attn_kernel(q_ref, k_ref, v_ref, o_ref, m_sc, l_sc, acc_sc, *,
                       nheads, head_dim, scale):
    kv = pl.program_id(2)

    @pl.when(kv == 0)
    def _init():
        m_sc[...] = jnp.full(m_sc.shape, -jnp.inf, m_sc.dtype)
        l_sc[...] = jnp.zeros(l_sc.shape, l_sc.dtype)
        acc_sc[...] = jnp.zeros(acc_sc.shape, acc_sc.dtype)

    q = q_ref[0].astype(jnp.float32)          # (TQ, D)
    k = k_ref[0].astype(jnp.float32)          # (TKV, D)
    v = v_ref[0]                              # (TKV, D), native dtype into MXU

    for h in range(nheads):                   # static unroll over heads
        sl = slice(h * head_dim, (h + 1) * head_dim)
        qh = _ln(q[:, sl])                    # QK-LayerNorm over head_dim
        kh = _ln(k[:, sl])
        s = jax.lax.dot_general(qh, kh, (((1,), (1,)), ((), ())),
                                preferred_element_type=jnp.float32) * scale
        m_prev = m_sc[h]                      # (TQ, 1)
        m_new = jnp.maximum(m_prev, jnp.max(s, axis=-1, keepdims=True))
        alpha = jnp.exp(m_prev - m_new)
        p = jnp.exp(s - m_new)
        l_sc[h] = alpha * l_sc[h] + jnp.sum(p, axis=-1, keepdims=True)
        acc_sc[h] = alpha * acc_sc[h] + jnp.dot(
            p.astype(v.dtype), v[:, sl], preferred_element_type=jnp.float32)
        m_sc[h] = m_new

    @pl.when(kv == pl.num_programs(2) - 1)
    def _finalize():
        outs = [acc_sc[h] / l_sc[h] for h in range(nheads)]   # (TQ, hd) each
        o_ref[0] = jnp.concatenate(outs, axis=-1).astype(o_ref.dtype)


def flash_attention(q, k, v, nheads, head_dim, scale):
    B, N, D = q.shape
    tq = _pick_tile(N, 256, 8)
    tk = _pick_tile(N, 256, 8)
    kernel = functools.partial(_flash_attn_kernel, nheads=nheads,
                               head_dim=head_dim, scale=scale)
    return pl.pallas_call(
        kernel,
        out_shape=jax.ShapeDtypeStruct((B, N, D), q.dtype),
        grid=(B, N // tq, N // tk),
        in_specs=[
            pl.BlockSpec((1, tq, D), lambda b, qi, ki: (b, qi, 0)),
            pl.BlockSpec((1, tk, D), lambda b, qi, ki: (b, ki, 0)),
            pl.BlockSpec((1, tk, D), lambda b, qi, ki: (b, ki, 0)),
        ],
        out_specs=pl.BlockSpec((1, tq, D), lambda b, qi, ki: (b, qi, 0)),
        scratch_shapes=[
            pltpu.VMEM((nheads, tq, 1), jnp.float32),          # running max
            pltpu.VMEM((nheads, tq, 1), jnp.float32),          # running sum
            pltpu.VMEM((nheads, tq, head_dim), jnp.float32),   # accumulator
        ],
        compiler_params=_cparams("parallel", "parallel", "arbitrary"),
    )(q, k, v)


# ----------------------------------------------------------------------------
# Kernel 3: Linear + ReLU^2 (mlp_proj), rows and output dim tiled
# ----------------------------------------------------------------------------
def _linear_relu2_kernel(x_ref, w_ref, b_ref, o_ref):
    out = jnp.dot(x_ref[...].astype(w_ref.dtype), w_ref[...],
                  preferred_element_type=jnp.float32)
    out = out + b_ref[...].astype(jnp.float32)
    out = jnp.maximum(out, 0.0)
    o_ref[...] = (out * out).astype(o_ref.dtype)


def linear_relu2(x2d, w_t, b):
    M, K = x2d.shape
    nout = w_t.shape[1]
    tm = _pick_tile(M, 512, 8)
    to = _pick_tile(nout, 512, 128)
    return pl.pallas_call(
        _linear_relu2_kernel,
        out_shape=jax.ShapeDtypeStruct((M, nout), x2d.dtype),
        grid=(M // tm, nout // to),
        in_specs=[
            pl.BlockSpec((tm, K), lambda i, j: (i, 0)),
            pl.BlockSpec((K, to), lambda i, j: (0, j)),
            pl.BlockSpec((1, to), lambda i, j: (0, j)),
        ],
        out_specs=pl.BlockSpec((tm, to), lambda i, j: (i, j)),
        compiler_params=_cparams("parallel", "parallel"),
    )(x2d, w_t, b.reshape(1, nout))


# ----------------------------------------------------------------------------
# Kernel 4: Linear (K-tiled, f32 accumulator) fused with gated residual and
#           (optionally) the following AdaLN modulate:
#   xo    = x + gate * (y @ W + b)
#   norm2 = LN(xo) * (1 + scale2) + shift2        (only in the _mod variant)
# ----------------------------------------------------------------------------
def _linear_res_kernel(y_ref, w_ref, b_ref, x_ref, gate_ref, xo_ref, acc_ref):
    kk = pl.program_id(2)

    @pl.when(kk == 0)
    def _init():
        acc_ref[...] = jnp.zeros(acc_ref.shape, acc_ref.dtype)

    acc_ref[...] += jnp.dot(y_ref[0].astype(w_ref.dtype), w_ref[...],
                            preferred_element_type=jnp.float32)

    @pl.when(kk == pl.num_programs(2) - 1)
    def _finalize():
        out = acc_ref[...] + b_ref[...].astype(jnp.float32)
        new_x = x_ref[0].astype(jnp.float32) + gate_ref[0].astype(jnp.float32) * out
        xo_ref[0] = new_x.astype(xo_ref.dtype)


def _linear_res_mod_kernel(y_ref, w_ref, b_ref, x_ref, gate_ref,
                           scale_ref, shift_ref, xo_ref, norm_ref, acc_ref):
    kk = pl.program_id(2)

    @pl.when(kk == 0)
    def _init():
        acc_ref[...] = jnp.zeros(acc_ref.shape, acc_ref.dtype)

    acc_ref[...] += jnp.dot(y_ref[0].astype(w_ref.dtype), w_ref[...],
                            preferred_element_type=jnp.float32)

    @pl.when(kk == pl.num_programs(2) - 1)
    def _finalize():
        out = acc_ref[...] + b_ref[...].astype(jnp.float32)
        new_x = x_ref[0].astype(jnp.float32) + gate_ref[0].astype(jnp.float32) * out
        xo_ref[0] = new_x.astype(xo_ref.dtype)
        mod = (_ln(new_x) * (1.0 + scale_ref[0].astype(jnp.float32))
               + shift_ref[0].astype(jnp.float32))
        norm_ref[0] = mod.astype(norm_ref.dtype)


def linear_residual(y, w_t, b, x, gate, scale2=None, shift2=None):
    B, N, K = y.shape
    D = w_t.shape[1]
    tn = _seq_tile(N, D)
    tk = _pick_tile(K, 512, 128)                              # reduction tile
    grid = (B, N // tn, K // tk)
    y_spec = pl.BlockSpec((1, tn, tk), lambda b, n, kk: (b, n, kk))
    w_spec = pl.BlockSpec((tk, D), lambda b, n, kk: (kk, 0))
    b_spec = pl.BlockSpec((1, D), lambda b, n, kk: (0, 0))
    x_spec = pl.BlockSpec((1, tn, D), lambda b, n, kk: (b, n, 0))
    g_spec = pl.BlockSpec((1, 1, D), lambda b, n, kk: (b, 0, 0))
    o_spec = pl.BlockSpec((1, tn, D), lambda b, n, kk: (b, n, 0))
    scratch = [pltpu.VMEM((tn, D), jnp.float32)]
    cp = _cparams("parallel", "parallel", "arbitrary")
    out_sds = jax.ShapeDtypeStruct((B, N, D), x.dtype)
    if scale2 is None:
        return pl.pallas_call(
            _linear_res_kernel,
            out_shape=out_sds,
            grid=grid,
            in_specs=[y_spec, w_spec, b_spec, x_spec, g_spec],
            out_specs=o_spec,
            scratch_shapes=scratch,
            compiler_params=cp,
        )(y, w_t, b.reshape(1, D), x, gate.reshape(B, 1, D))
    return pl.pallas_call(
        _linear_res_mod_kernel,
        out_shape=(out_sds, out_sds),
        grid=grid,
        in_specs=[y_spec, w_spec, b_spec, x_spec, g_spec, g_spec, g_spec],
        out_specs=(o_spec, o_spec),
        scratch_shapes=scratch,
        compiler_params=cp,
    )(y, w_t, b.reshape(1, D), x, gate.reshape(B, 1, D),
      scale2.reshape(B, 1, D), shift2.reshape(B, 1, D))


# ----------------------------------------------------------------------------
# Kernel 5: depthwise conv1d (k=7, pad=3, along N) fused with LayerNorm,
#           tiled over the sequence with a halo taken from prev/next tiles.
# ----------------------------------------------------------------------------
def _dwconv_ln_kernel(prev_ref, cur_ref, next_ref, w_ref, b_ref, out_ref, *,
                      tn, ksize):
    pad = (ksize - 1) // 2
    n_idx = pl.program_id(1)
    n_last = pl.num_programs(1) - 1

    cur = cur_ref[0].astype(jnp.float32)                        # (TN, D)
    prev_tail = prev_ref[0].astype(jnp.float32)[tn - pad:, :]   # (pad, D)
    next_head = next_ref[0].astype(jnp.float32)[:pad, :]        # (pad, D)
    # conv zero-padding at the sequence edges handled in-kernel
    prev_tail = jnp.where(n_idx > 0, prev_tail, 0.0)
    next_head = jnp.where(n_idx < n_last, next_head, 0.0)
    window = jnp.concatenate([prev_tail, cur, next_head], axis=0)  # (TN+2p, D)

    w = w_ref[...].astype(jnp.float32)                          # (ksize, D)
    b = b_ref[...].astype(jnp.float32)                          # (1, D)
    acc = jnp.zeros((tn, cur.shape[-1]), jnp.float32) + b
    for kk in range(ksize):                                     # static unroll
        acc = acc + window[kk:kk + tn, :] * w[kk:kk + 1, :]
    out_ref[0] = _ln(acc).astype(out_ref.dtype)


def dwconv_ln(x, w_dw, b_dw):
    """x: (B,N,D); w_dw: (D,K) PyTorch depthwise weight (squeezed); b_dw: (D,)."""
    B, N, D = x.shape
    K = w_dw.shape[1]
    tn = _seq_tile(N, D)
    nt = N // tn
    kernel = functools.partial(_dwconv_ln_kernel, tn=tn, ksize=K)
    blk = (1, tn, D)
    return pl.pallas_call(
        kernel,
        out_shape=jax.ShapeDtypeStruct((B, N, D), x.dtype),
        grid=(B, nt),
        in_specs=[
            pl.BlockSpec(blk, lambda b, n: (b, jnp.maximum(n - 1, 0), 0)),
            pl.BlockSpec(blk, lambda b, n: (b, n, 0)),
            pl.BlockSpec(blk, lambda b, n: (b, jnp.minimum(n + 1, nt - 1), 0)),
            pl.BlockSpec((K, D), lambda b, n: (0, 0)),
            pl.BlockSpec((1, D), lambda b, n: (0, 0)),
        ],
        out_specs=pl.BlockSpec(blk, lambda b, n: (b, n, 0)),
        compiler_params=_cparams("parallel", "parallel"),
    )(x, x, x, w_dw.T, b_dw.reshape(1, D))


# ----------------------------------------------------------------------------
# DiTBlock forward (mask=None, rope=None path, eval-mode dropout)
# ----------------------------------------------------------------------------
def dit_block(x, t, params, head_dim, mxu_dtype=None):
    B, N, D = x.shape
    H = D // head_dim

    def wcast(w):
        return w if mxu_dtype is None else w.astype(mxu_dtype)

    # --- AdaLayerNormZero timestep projection: tiny (B,6D) GEMM, left to XLA
    silu_t = t * jax.nn.sigmoid(t)
    proj = silu_t @ params["adaln_w"].T + params["adaln_b"]          # (B, 6D)
    (shift_msa, scale_msa, gate_msa,
     shift_mlp, scale_mlp, gate_mlp) = jnp.split(proj, 6, axis=1)

    # --- fused LN + modulate + QKV projections (norm never hits HBM) --------
    q, k, v = adaln_qkv(x, scale_msa, shift_msa,
                        wcast(params["wq"].T), wcast(params["wk"].T),
                        wcast(params["wv"].T),
                        params["bq"], params["bk"], params["bv"])

    # --- flash attention with fused QK-LayerNorm (scale = 1/dim per module) -
    attn = flash_attention(q, k, v, H, head_dim, scale=1.0 / D)

    # --- fused Wo projection + gated residual + MLP-branch modulate ---------
    x1, norm2 = linear_residual(attn, wcast(params["wo"].T), params["bo"],
                                x, gate_msa, scale_mlp, shift_mlp)

    # --- MLP branch ----------------------------------------------------------
    h = dwconv_ln(norm2, params["dw_w"], params["dw_b"])             # conv + LN
    h2d = linear_relu2(h.reshape(B * N, D), wcast(params["w1"].T), params["b1"])
    inner = h2d.shape[1]
    out = linear_residual(h2d.reshape(B, N, inner), wcast(params["w2"].T),
                          params["b2"], x1, gate_mlp)                # w2 + residual
    return out


# ----------------------------------------------------------------------------
# Pure-JAX reference of the same forward pass
# ----------------------------------------------------------------------------
def dit_block_ref(x, t, params, head_dim):
    B, N, D = x.shape
    H = D // head_dim

    def ln(v):
        m = jnp.mean(v, axis=-1, keepdims=True)
        var = jnp.mean((v - m) ** 2, axis=-1, keepdims=True)
        return (v - m) / jnp.sqrt(var + 1e-6)

    h = t * jax.nn.sigmoid(t)
    proj = h @ params["adaln_w"].T + params["adaln_b"]
    (shift_msa, scale_msa, gate_msa,
     shift_mlp, scale_mlp, gate_mlp) = jnp.split(proj, 6, axis=1)

    norm = ln(x) * (1 + scale_msa[:, None]) + shift_msa[:, None]

    q = norm @ params["wq"].T + params["bq"]
    k = norm @ params["wk"].T + params["bk"]
    v = norm @ params["wv"].T + params["bv"]
    q = q.reshape(B, N, H, head_dim).transpose(0, 2, 1, 3)
    k = k.reshape(B, N, H, head_dim).transpose(0, 2, 1, 3)
    v = v.reshape(B, N, H, head_dim).transpose(0, 2, 1, 3)
    qn, kn = ln(q), ln(k)
    scores = jnp.einsum("bhqd,bhkd->bhqk", qn, kn) * (1.0 / D)
    probs = jax.nn.softmax(scores, axis=-1)
    attn = jnp.einsum("bhqk,bhkd->bhqd", probs, v)
    attn = attn.transpose(0, 2, 1, 3).reshape(B, N, D)
    attn = attn @ params["wo"].T + params["bo"]

    x = x + gate_msa[:, None] * attn

    norm2 = ln(x) * (1 + scale_mlp[:, None]) + shift_mlp[:, None]
    ksize = params["dw_w"].shape[1]
    xp = jnp.pad(norm2, ((0, 0), (3, 3), (0, 0)))
    dw = sum(xp[:, kk:kk + N, :] * params["dw_w"][:, kk][None, None, :]
             for kk in range(ksize))
    dw = dw + params["dw_b"]
    hh = ln(dw)
    hh = hh @ params["w1"].T + params["b1"]
    hh = jnp.maximum(hh, 0.0) ** 2
    hh = hh @ params["w2"].T + params["b2"]
    x = x + gate_mlp[:, None] * hh
    return x


if __name__ == "__main__":
    B, N, D, head_dim = 2, 8, 32, 16
    ff_mult = 4
    inner = D * ff_mult

    key = jax.random.PRNGKey(0)
    keys = jax.random.split(key, 18)

    def uinit(k, shape, fan_in):
        bound = 1.0 / (fan_in ** 0.5)
        return jax.random.uniform(k, shape, minval=-bound, maxval=bound,
                                  dtype=jnp.float32)

    x = jax.random.normal(keys[0], (B, N, D), dtype=jnp.float32)
    t = jax.random.normal(keys[1], (B, D), dtype=jnp.float32)

    params = {
        "adaln_w": uinit(keys[2], (6 * D, D), D),
        "adaln_b": uinit(keys[3], (6 * D,), D),
        "wq": uinit(keys[4], (D, D), D), "bq": uinit(keys[5], (D,), D),
        "wk": uinit(keys[6], (D, D), D), "bk": uinit(keys[7], (D,), D),
        "wv": uinit(keys[8], (D, D), D), "bv": uinit(keys[9], (D,), D),
        "wo": uinit(keys[10], (D, D), D), "bo": uinit(keys[11], (D,), D),
        "dw_w": uinit(keys[12], (D, 7), 7), "dw_b": uinit(keys[13], (D,), 7),
        "w1": uinit(keys[14], (inner, D), D), "b1": uinit(keys[15], (inner,), D),
        "w2": uinit(keys[16], (D, inner), inner), "b2": uinit(keys[17], (D,), inner),
    }

    out = dit_block(x, t, params, head_dim)
    out = jax.block_until_ready(out)

    ref = dit_block_ref(x, t, params, head_dim)
    assert out.shape == (B, N, D)
    max_err = float(jnp.max(jnp.abs(out - ref)))
    assert jnp.allclose(out, ref, atol=2e-3, rtol=2e-3), f"max abs err {max_err}"

    print("KERNEL_OK")
</pallas_src>

<mosaic_0001>
module attributes {stable_mosaic.version = 11 : i64} {
  func.func @_adaln_qkv_kernel(%arg0: i32, %arg1: i32, %arg2: i32, %arg3: memref<1x8x32xf32, #tpu.memory_space<vmem>>, %arg4: memref<1x1x32xf32, #tpu.memory_space<vmem>>, %arg5: memref<1x1x32xf32, #tpu.memory_space<vmem>>, %arg6: memref<32x32xf32, #tpu.memory_space<vmem>>, %arg7: memref<32x32xf32, #tpu.memory_space<vmem>>, %arg8: memref<32x32xf32, #tpu.memory_space<vmem>>, %arg9: memref<1x32xf32, #tpu.memory_space<vmem>>, %arg10: memref<1x32xf32, #tpu.memory_space<vmem>>, %arg11: memref<1x32xf32, #tpu.memory_space<vmem>>, %arg12: memref<1x8x32xf32, #tpu.memory_space<vmem>>, %arg13: memref<1x8x32xf32, #tpu.memory_space<vmem>>, %arg14: memref<1x8x32xf32, #tpu.memory_space<vmem>>) attributes {dimension_semantics = [#tpu.dimension_semantics<parallel>, #tpu.dimension_semantics<parallel>, #tpu.dimension_semantics<parallel>], iteration_bounds = array<i64: 2, 1, 1>, scalar_prefetch = 0 : i64, scratch_operands = 0 : i64, tpu.core_type = #tpu.core_type<tc>, window_params = [{transform_indices = @transform_0, window_bounds = array<i64: 1, 8, 32>}, {transform_indices = @transform_1, window_bounds = array<i64: 1, 1, 32>}, {transform_indices = @transform_2, window_bounds = array<i64: 1, 1, 32>}, {transform_indices = @transform_3, window_bounds = array<i64: 32, 32>}, {transform_indices = @transform_4, window_bounds = array<i64: 32, 32>}, {transform_indices = @transform_5, window_bounds = array<i64: 32, 32>}, {transform_indices = @transform_6, window_bounds = array<i64: 1, 32>}, {transform_indices = @transform_7, window_bounds = array<i64: 1, 32>}, {transform_indices = @transform_8, window_bounds = array<i64: 1, 32>}, {transform_indices = @transform_9, window_bounds = array<i64: 1, 8, 32>}, {transform_indices = @transform_10, window_bounds = array<i64: 1, 8, 32>}, {transform_indices = @transform_11, window_bounds = array<i64: 1, 8, 32>}]} {
    %c0 = arith.constant 0 : index
    %c0_0 = arith.constant 0 : index
    %c0_1 = arith.constant 0 : index
    %0 = vector.load %arg3[%c0, %c0_0, %c0_1] : memref<1x8x32xf32, #tpu.memory_space<vmem>>, vector<1x8x32xf32>
    %1 = vector.shape_cast %0 : vector<1x8x32xf32> to vector<8x32xf32>
    %cst = arith.constant dense<0.000000e+00> : vector<8xf32>
    %2 = vector.multi_reduction <add>, %1, %cst [1] : vector<8x32xf32> to vector<8xf32>
    %3 = vector.shape_cast %2 : vector<8xf32> to vector<8x1xf32>
    %cst_2 = arith.constant 3.200000e+01 : f32
    %4 = vector.broadcast %cst_2 : f32 to vector<8x1xf32>
    %5 = arith.divf %3, %4 : vector<8x1xf32>
    %6 = vector.broadcast %5 : vector<8x1xf32> to vector<8x32xf32>
    %7 = arith.subf %1, %6 : vector<8x32xf32>
    %8 = arith.mulf %7, %7 : vector<8x32xf32>
    %cst_3 = arith.constant dense<0.000000e+00> : vector<8xf32>
    %9 = vector.multi_reduction <add>, %8, %cst_3 [1] : vector<8x32xf32> to vector<8xf32>
    %10 = vector.shape_cast %9 : vector<8xf32> to vector<8x1xf32>
    %cst_4 = arith.constant 3.200000e+01 : f32
    %11 = vector.broadcast %cst_4 : f32 to vector<8x1xf32>
    %12 = arith.divf %10, %11 : vector<8x1xf32>
    %cst_5 = arith.constant 9.99999997E-7 : f32
    %13 = vector.broadcast %cst_5 : f32 to vector<8x1xf32>
    %14 = arith.addf %12, %13 : vector<8x1xf32>
    %15 = math.rsqrt %14 : vector<8x1xf32>
    %16 = vector.broadcast %15 : vector<8x1xf32> to vector<8x32xf32>
    %17 = arith.mulf %7, %16 : vector<8x32xf32>
    %c0_6 = arith.constant 0 : index
    %c0_7 = arith.constant 0 : index
    %c0_8 = arith.constant 0 : index
    %18 = vector.load %arg4[%c0_6, %c0_7, %c0_8] : memref<1x1x32xf32, #tpu.memory_space<vmem>>, vector<1x1x32xf32>
    %19 = vector.shape_cast %18 : vector<1x1x32xf32> to vector<1x32xf32>
    %cst_9 = arith.constant 1.000000e+00 : f32
    %20 = vector.broadcast %cst_9 : f32 to vector<1x32xf32>
    %21 = arith.addf %20, %19 : vector<1x32xf32>
    %22 = vector.broadcast %21 : vector<1x32xf32> to vector<8x32xf32>
    %23 = arith.mulf %17, %22 : vector<8x32xf32>
    %c0_10 = arith.constant 0 : index
    %c0_11 = arith.constant 0 : index
    %c0_12 = arith.constant 0 : index
    %24 = vector.load %arg5[%c0_10, %c0_11, %c0_12] : memref<1x1x32xf32, #tpu.memory_space<vmem>>, vector<1x1x32xf32>
    %25 = vector.shape_cast %24 : vector<1x1x32xf32> to vector<1x32xf32>
    %26 = vector.broadcast %25 : vector<1x32xf32> to vector<8x32xf32>
    %27 = arith.addf %23, %26 : vector<8x32xf32>
    %c0_13 = arith.constant 0 : index
    %c0_14 = arith.constant 0 : index
    %28 = vector.load %arg6[%c0_13, %c0_14] : memref<32x32xf32, #tpu.memory_space<vmem>>, vector<32x32xf32>
    %cst_15 = arith.constant dense<0.000000e+00> : vector<8x32xf32>
    %29 = tpu.matmul %27, %28, %cst_15 {dimension_numbers = #tpu.dot_dimension_numbers<[1], [0], [0], [1], [0, 0, 1, 1], [], []>} : vector<8x32xf32>, vector<32x32xf32>, vector<8x32xf32> -> vector<8x32xf32>
    %c0_16 = arith.constant 0 : index
    %c0_17 = arith.constant 0 : index
    %30 = vector.load %arg9[%c0_16, %c0_17] : memref<1x32xf32, #tpu.memory_space<vmem>>, vector<1x32xf32>
    %31 = vector.broadcast %30 : vector<1x32xf32> to vector<8x32xf32>
    %32 = arith.addf %29, %31 : vector<8x32xf32>
    %c0_18 = arith.constant 0 : index
    %c0_19 = arith.constant 0 : index
    %c0_20 = arith.constant 0 : index
    %33 = vector.load %arg12[%c0_18, %c0_19, %c0_20] : memref<1x8x32xf32, #tpu.memory_space<vmem>>, vector<1x8x32xf32>
    %34 = vector.shape_cast %33 : vector<1x8x32xf32> to vector<8x32xf32>
    %35 = vector.shape_cast %32 : vector<8x32xf32> to vector<1x8x32xf32>
    tpu.vector_store %arg12[%c0_18, %c0_19, %c0_20], %35 {strides = array<i32>} : memref<1x8x32xf32, #tpu.memory_space<vmem>>, vector<1x8x32xf32>,
    %c0_21 = arith.constant 0 : index
    %c0_22 = arith.constant 0 : index
    %36 = vector.load %arg7[%c0_21, %c0_22] : memref<32x32xf32, #tpu.memory_space<vmem>>, vector<32x32xf32>
    %cst_23 = arith.constant dense<0.000000e+00> : vector<8x32xf32>
    %37 = tpu.matmul %27, %36, %cst_23 {dimension_numbers = #tpu.dot_dimension_numbers<[1], [0], [0], [1], [0, 0, 1, 1], [], []>} : vector<8x32xf32>, vector<32x32xf32>, vector<8x32xf32> -> vector<8x32xf32>
    %c0_24 = arith.constant 0 : index
    %c0_25 = arith.constant 0 : index
    %38 = vector.load %arg10[%c0_24, %c0_25] : memref<1x32xf32, #tpu.memory_space<vmem>>, vector<1x32xf32>
    %39 = vector.broadcast %38 : vector<1x32xf32> to vector<8x32xf32>
    %40 = arith.addf %37, %39 : vector<8x32xf32>
    %c0_26 = arith.constant 0 : index
    %c0_27 = arith.constant 0 : index
    %c0_28 = arith.constant 0 : index
    %41 = vector.load %arg13[%c0_26, %c0_27, %c0_28] : memref<1x8x32xf32, #tpu.memory_space<vmem>>, vector<1x8x32xf32>
    %42 = vector.shape_cast %41 : vector<1x8x32xf32> to vector<8x32xf32>
    %43 = vector.shape_cast %40 : vector<8x32xf32> to vector<1x8x32xf32>
    tpu.vector_store %arg13[%c0_26, %c0_27, %c0_28], %43 {strides = array<i32>} : memref<1x8x32xf32, #tpu.memory_space<vmem>>, vector<1x8x32xf32>,
    %c0_29 = arith.constant 0 : index
    %c0_30 = arith.constant 0 : index
    %44 = vector.load %arg8[%c0_29, %c0_30] : memref<32x32xf32, #tpu.memory_space<vmem>>, vector<32x32xf32>
    %cst_31 = arith.constant dense<0.000000e+00> : vector<8x32xf32>
    %45 = tpu.matmul %27, %44, %cst_31 {dimension_numbers = #tpu.dot_dimension_numbers<[1], [0], [0], [1], [0, 0, 1, 1], [], []>} : vector<8x32xf32>, vector<32x32xf32>, vector<8x32xf32> -> vector<8x32xf32>
    %c0_32 = arith.constant 0 : index
    %c0_33 = arith.constant 0 : index
    %46 = vector.load %arg11[%c0_32, %c0_33] : memref<1x32xf32, #tpu.memory_space<vmem>>, vector<1x32xf32>
    %47 = vector.broadcast %46 : vector<1x32xf32> to vector<8x32xf32>
    %48 = arith.addf %45, %47 : vector<8x32xf32>
    %c0_34 = arith.constant 0 : index
    %c0_35 = arith.constant 0 : index
    %c0_36 = arith.constant 0 : index
    %49 = vector.load %arg14[%c0_34, %c0_35, %c0_36] : memref<1x8x32xf32, #tpu.memory_space<vmem>>, vector<1x8x32xf32>
    %50 = vector.shape_cast %49 : vector<1x8x32xf32> to vector<8x32xf32>
    %51 = vector.shape_cast %48 : vector<8x32xf32> to vector<1x8x32xf32>
    tpu.vector_store %arg14[%c0_34, %c0_35, %c0_36], %51 {strides = array<i32>} : memref<1x8x32xf32, #tpu.memory_space<vmem>>, vector<1x8x32xf32>,
    return
  }
  func.func @transform_0(%arg0: i32, %arg1: i32, %arg2: i32) -> (i32, i32, i32) {
    %c0_i32 = arith.constant 0 : i32
    %c0_i32_0 = arith.constant 0 : i32
    return %arg0, %arg1, %c0_i32 : i32, i32, i32
  }
  func.func @transform_1(%arg0: i32, %arg1: i32, %arg2: i32) -> (i32, i32, i32) {
    %c0_i32 = arith.constant 0 : i32
    %c0_i32_0 = arith.constant 0 : i32
    %c0_i32_1 = arith.constant 0 : i32
    return %arg0, %c0_i32, %c0_i32_0 : i32, i32, i32
  }
  func.func @transform_2(%arg0: i32, %arg1: i32, %arg2: i32) -> (i32, i32, i32) {
    %c0_i32 = arith.constant 0 : i32
    %c0_i32_0 = arith.constant 0 : i32
    %c0_i32_1 = arith.constant 0 : i32
    return %arg0, %c0_i32, %c0_i32_0 : i32, i32, i32
  }
  func.func @transform_3(%arg0: i32, %arg1: i32, %arg2: i32) -> (i32, i32) {
    %c0_i32 = arith.constant 0 : i32
    %c0_i32_0 = arith.constant 0 : i32
    return %c0_i32, %arg2 : i32, i32
  }
  func.func @transform_4(%arg0: i32, %arg1: i32, %arg2: i32) -> (i32, i32) {
    %c0_i32 = arith.constant 0 : i32
    %c0_i32_0 = arith.constant 0 : i32
    return %c0_i32, %arg2 : i32, i32
  }
  func.func @transform_5(%arg0: i32, %arg1: i32, %arg2: i32) -> (i32, i32) {
    %c0_i32 = arith.constant 0 : i32
    %c0_i32_0 = arith.constant 0 : i32
    return %c0_i32, %arg2 : i32, i32
  }
  func.func @transform_6(%arg0: i32, %arg1: i32, %arg2: i32) -> (i32, i32) {
    %c0_i32 = arith.constant 0 : i32
    %c0_i32_0 = arith.constant 0 : i32
    return %c0_i32, %arg2 : i32, i32
  }
  func.func @transform_7(%arg0: i32, %arg1: i32, %arg2: i32) -> (i32, i32) {
    %c0_i32 = arith.constant 0 : i32
    %c0_i32_0 = arith.constant 0 : i32
    return %c0_i32, %arg2 : i32, i32
  }
  func.func @transform_8(%arg0: i32, %arg1: i32, %arg2: i32) -> (i32, i32) {
    %c0_i32 = arith.constant 0 : i32
    %c0_i32_0 = arith.constant 0 : i32
    return %c0_i32, %arg2 : i32, i32
  }
  func.func @transform_9(%arg0: i32, %arg1: i32, %arg2: i32) -> (i32, i32, i32) {
    %c0_i32 = arith.constant 0 : i32
    return %arg0, %arg1, %arg2 : i32, i32, i32
  }
  func.func @transform_10(%arg0: i32, %arg1: i32, %arg2: i32) -> (i32, i32, i32) {
    %c0_i32 = arith.constant 0 : i32
    return %arg0, %arg1, %arg2 : i32, i32, i32
  }
  func.func @transform_11(%arg0: i32, %arg1: i32, %arg2: i32) -> (i32, i32, i32) {
    %c0_i32 = arith.constant 0 : i32
    return %arg0, %arg1, %arg2 : i32, i32, i32
  }
}

</mosaic_0001>

<llo_original>
// kernel: tpu_custom_call.1
$region0: #{tpu_custom_call.1}
  #allocation0 [shape = 'u32[]', space=smem, size = 0x4, offset = 0x4, fixed_abs, tag = 'smem constant byte address 0x4 - core index']
  #allocation1 [shape = 'u32[144,128]{1,0:T(1,128)}', space=vmem, size = 0x12000, scoped, tag = 'internal scratch']
  %s0 = inlined_call_operand.hbm [shape: f32[2,8,32], index: 0, kind: input, shape index: {}]
  %s1 = inlined_call_operand.hbm [shape: f32[2,1,32], index: 1, kind: input, shape index: {}]
  %s2 = inlined_call_operand.vmem [shape: f32[2,1,32], index: 2, kind: input, shape index: {}]
  %s3 = inlined_call_operand.hbm [shape: f32[32,32], index: 3, kind: input, shape index: {}]
  %s4 = inlined_call_operand.hbm [shape: f32[32,32], index: 4, kind: input, shape index: {}]
  %s5 = inlined_call_operand.hbm [shape: f32[32,32], index: 5, kind: input, shape index: {}]
  %s6 = inlined_call_operand.vmem [shape: f32[1,32], index: 6, kind: input, shape index: {}]
  %s7 = inlined_call_operand.vmem [shape: f32[1,32], index: 7, kind: input, shape index: {}]
  %s8 = inlined_call_operand.vmem [shape: f32[1,32], index: 8, kind: input, shape index: {}]
  %s9 = inlined_call_operand.hbm [shape: f32[2,8,32], index: 9, kind: output, shape index: {0}]
  %s10 = inlined_call_operand.hbm [shape: f32[2,8,32], index: 10, kind: output, shape index: {1}]
  %s11 = inlined_call_operand.hbm [shape: f32[2,8,32], index: 11, kind: output, shape index: {2}]
  %12 = xla_tuple %s9, %s10, %s11
  %s13 = sld [smem:[#allocation0]]
  $region105: #{tpu_custom_call.1} parent=0
    _
  %s15 = ssub.s32 1, %s13
  %s16 = scalar_select 0, %s15, %s13
  $region1: #{tpu_custom_call.1} parent=0
    #allocation2 [shape = 'u8[8192]{0}', space=vmem, size = 0x2000, scoped, tag = 'input window, operand 0']
    #allocation3 [shape = 's32[2]{0}', space=sflag, size = 0x8, scoped, tag = 'scoped memory for tpu_custom_call.1']
    #allocation4 [shape = 's32[2]{0}', space=sflag, size = 0x8, scoped, tag = 'scoped memory for tpu_custom_call.1']
    #allocation5 [shape = 'u8[1024]{0}', space=vmem, size = 0x400, scoped, tag = 'input window, operand 1']
    #allocation6 [shape = 's32[2]{0}', space=sflag, size = 0x8, scoped, tag = 'scoped memory for tpu_custom_call.1']
    #allocation7 [shape = 'u8[16384]{0}', space=vmem, size = 0x4000, scoped, tag = 'input window, operand 3, single buffered']
    #allocation8 [shape = 'u8[16384]{0}', space=vmem, size = 0x4000, scoped, tag = 'input window, operand 4, single buffered']
    #allocation9 [shape = 's32[1]{0}', space=sflag, size = 0x4, scoped, tag = 'scoped memory for tpu_custom_call.1']
    #allocation10 [shape = 'u8[16384]{0}', space=vmem, size = 0x4000, scoped, tag = 'input window, operand 5, single buffered']
    #allocation11 [shape = 'u8[8192]{0}', space=vmem, size = 0x2000, scoped, tag = 'output window, operand 0']
    #allocation12 [shape = 'u8[8192]{0}', space=vmem, size = 0x2000, scoped, tag = 'output window, operand 1']
    #allocation13 [shape = 's32[2]{0}', space=sflag, size = 0x8, scoped, tag = 'scoped memory for tpu_custom_call.1']
    #allocation14 [shape = 'u8[8192]{0}', space=vmem, size = 0x2000, scoped, tag = 'output window, operand 2']
    %17 = vsyncpa [#allocation3], 0
    %s18 = scalar_lea.sflag [#allocation3], 1
    %19 = vsyncpa %s18, 0
    %20 = vsyncpa [#allocation6], 0
    %s21 = scalar_lea.sflag [#allocation6], 1
    %22 = vsyncpa %s21, 0
    %23 = vsyncpa [#allocation9], 0
    %24 = vsyncpa [#allocation4], 0
    %s25 = scalar_lea.sflag [#allocation4], 1
    %26 = vsyncpa %s25, 0
    %27 = vsyncpa [#allocation13], 0
    %s28 = scalar_lea.sflag [#allocation13], 1
    %29 = vsyncpa %s28, 0
    loop: start=0, step=1, limit=4
    $region2: #{tpu_custom_call.1} parent=1 // loop_pre_header
      _
    $region3: #{tpu_custom_call.1} parent=1 // loop_header
      %s31 = sphi 0, %s35
      %p32 = scmp.ge.s32.totalorder %s31, 4
      %s38 = sphi 0, %s57
      %s39 = sphi 0, %s53
      %s40 = sphi 0, %s49
      %s41 = sphi 0, %s38
      %s42 = sphi 0, %s39
      %s43 = sphi 0, %s40
      %s44 = sphi 0, %s41
      %s45 = sphi 0, %s42
      %s46 = sphi 0, %s43
      %s62 = sphi 0, %s64
      %s65 = sphi 0, %s62
      %s66 = sphi 0, %s65
      %s82 = sphi 0, %s66
      %s88 = sphi 0, %s90
      %s91 = sphi 0, %s88
      %s92 = sphi 0, %s91
      %s108 = sphi 0, %s92
      %s114 = sphi 0, %s116
      %s117 = sphi 0, %s114
      %s118 = sphi 0, %s117
      %s134 = sphi 0, %s118
      %s140 = sphi 0, %s142
      %s143 = sphi 0, %s140
      %s144 = sphi 0, %s143
      %s160 = sphi 0, %s144
      %s166 = sphi 0, %s168
      %s169 = sphi 0, %s166
      %s170 = sphi 0, %s169
      %s186 = sphi 0, %s170
      %s192 = sphi 0, %s194
      %s195 = sphi 0, %s192
      %s196 = sphi 0, %s195
      %s212 = sphi 0, %s196
      %s218 = sphi 0, %s220
      %s221 = sphi 0, %s218
      %s222 = sphi 0, %s221
      %s238 = sphi 0, %s222
      %s244 = sphi 0, %s246
      %s247 = sphi 0, %s244
      %s248 = sphi 0, %s247
      %s264 = sphi 0, %s248
      %s270 = sphi 0, %s272
      %s273 = sphi 0, %s270
      %s274 = sphi 0, %s273
      %s290 = sphi 0, %s274
      %s300 = sphi 0, %s302
      %s303 = sphi 0, %s300
      %s304 = sphi 0, %s303
      %s320 = sphi 0, %s304
      %s330 = sphi 0, %s332
      %s333 = sphi 0, %s330
      %s334 = sphi 0, %s333
      %s350 = sphi 0, %s334
      %s360 = sphi 0, %s362
      %s363 = sphi 0, %s360
      %s364 = sphi 0, %s363
      %s380 = sphi 0, %s364
    $region4: #{tpu_custom_call.1} parent=1 // loop_header_branch
      %34 = sbr.rel (%p32) target = $region8
    $region5: #{tpu_custom_call.1} parent=1 // loop_body
      %s36 = ssub.s32 %s31, 1
      %s37 = ssub.s32 %s31, 2
      %s47 = sadd.s32 1, %s40
      %p48 = scmp.ge.s32.totalorder %s47, 1
      %s49 = scalar_select %p48, 0, %s47
      %s50 = sadd.s32 1, %s39
      %s51 = scalar_select %p48, %s50, %s39
      %p52 = scmp.ge.s32.totalorder %s51, 1
      %s53 = scalar_select %p52, 0, %s51
      %s54 = sadd.s32 1, %s38
      %s55 = scalar_select %p52, %s54, %s38
      %p56 = scmp.ge.s32.totalorder %s55, 2
      %s57 = scalar_select %p56, 0, %s55
      %s58 = ssub.s32 %s38, %s57
      %s59 = ssub.s32 %s39, %s53
      %s60 = sor.u32 %s58, %s59
      %p61 = scmp.eq.s32.totalorder %s60, 0
      %s63 = sadd.s32 %s62, 1
      %s64 = scalar_select %p61, %s62, %s63
      %p67 = pneg %p61
      %p68 = scmp.eq.s32.totalorder %s31, 1
      %p69 = por %p67, %p68
      %p70 = scmp.ne.s32.totalorder %s62, %s65
      %p71 = scmp.eq.s32.totalorder %s31, 0
      %p72 = por %p70, %p71
      %p73 = scmp.ne.s32.totalorder %s62, %s65
      %p74 = scmp.eq.s32.totalorder %s36, 1
      %p75 = por %p73, %p74
      %p76 = scmp.ne.s32.totalorder %s65, %s66
      %p77 = scmp.eq.s32.totalorder %s36, 0
      %p78 = por %p76, %p77
      %p79 = scmp.ne.s32.totalorder %s65, %s66
      %p80 = scmp.eq.s32.totalorder %s37, 1
      %p81 = por %p79, %p80
      %p83 = scmp.ne.s32.totalorder %s66, %s82
      %p84 = scmp.eq.s32.totalorder %s37, 0
      %p85 = por %p83, %p84
      %s86 = ssub.s32 %s38, %s57
      %p87 = scmp.eq.s32.totalorder %s86, 0
      %s89 = sadd.s32 %s88, 1
      %s90 = scalar_select %p87, %s88, %s89
      %p93 = pneg %p87
      %p94 = scmp.eq.s32.totalorder %s31, 1
      %p95 = por %p93, %p94
      %p96 = scmp.ne.s32.totalorder %s88, %s91
      %p97 = scmp.eq.s32.totalorder %s31, 0
      %p98 = por %p96, %p97
      %p99 = scmp.ne.s32.totalorder %s88, %s91
      %p100 = scmp.eq.s32.totalorder %s36, 1
      %p101 = por %p99, %p100
      %p102 = scmp.ne.s32.totalorder %s91, %s92
      %p103 = scmp.eq.s32.totalorder %s36, 0
      %p104 = por %p102, %p103
      %p105 = scmp.ne.s32.totalorder %s91, %s92
      %p106 = scmp.eq.s32.totalorder %s37, 1
      %p107 = por %p105, %p106
      %p109 = scmp.ne.s32.totalorder %s92, %s108
      %p110 = scmp.eq.s32.totalorder %s37, 0
      %p111 = por %p109, %p110
      %s112 = ssub.s32 %s38, %s57
      %p113 = scmp.eq.s32.totalorder %s112, 0
      %s115 = sadd.s32 %s114, 1
      %s116 = scalar_select %p113, %s114, %s115
      %p119 = pneg %p113
      %p120 = scmp.eq.s32.totalorder %s31, 1
      %p121 = por %p119, %p120
      %p122 = scmp.ne.s32.totalorder %s114, %s117
      %p123 = scmp.eq.s32.totalorder %s31, 0
      %p124 = por %p122, %p123
      %p125 = scmp.ne.s32.totalorder %s114, %s117
      %p126 = scmp.eq.s32.totalorder %s36, 1
      %p127 = por %p125, %p126
      %p128 = scmp.ne.s32.totalorder %s117, %s118
      %p129 = scmp.eq.s32.totalorder %s36, 0
      %p130 = por %p128, %p129
      %p131 = scmp.ne.s32.totalorder %s117, %s118
      %p132 = scmp.eq.s32.totalorder %s37, 1
      %p133 = por %p131, %p132
      %p135 = scmp.ne.s32.totalorder %s118, %s134
      %p136 = scmp.eq.s32.totalorder %s37, 0
      %p137 = por %p135, %p136
      %s138 = ssub.s32 %s40, %s49
      %p139 = scmp.eq.s32.totalorder %s138, 0
      %s141 = sadd.s32 %s140, 1
      %s142 = scalar_select %p139, %s140, %s141
      %p145 = pneg %p139
      %p146 = scmp.eq.s32.totalorder %s31, 1
      %p147 = por %p145, %p146
      %p148 = scmp.ne.s32.totalorder %s140, %s143
      %p149 = scmp.eq.s32.totalorder %s31, 0
      %p150 = por %p148, %p149
      %p151 = scmp.ne.s32.totalorder %s140, %s143
      %p152 = scmp.eq.s32.totalorder %s36, 1
      %p153 = por %p151, %p152
      %p154 = scmp.ne.s32.totalorder %s143, %s144
      %p155 = scmp.eq.s32.totalorder %s36, 0
      %p156 = por %p154, %p155
      %p157 = scmp.ne.s32.totalorder %s143, %s144
      %p158 = scmp.eq.s32.totalorder %s37, 1
      %p159 = por %p157, %p158
      %p161 = scmp.ne.s32.totalorder %s144, %s160
      %p162 = scmp.eq.s32.totalorder %s37, 0
      %p163 = por %p161, %p162
      %s164 = ssub.s32 %s40, %s49
      %p165 = scmp.eq.s32.totalorder %s164, 0
      %s167 = sadd.s32 %s166, 1
      %s168 = scalar_select %p165, %s166, %s167
      %p171 = pneg %p165
      %p172 = scmp.eq.s32.totalorder %s31, 1
      %p173 = por %p171, %p172
      %p174 = scmp.ne.s32.totalorder %s166, %s169
      %p175 = scmp.eq.s32.totalorder %s31, 0
      %p176 = por %p174, %p175
      %p177 = scmp.ne.s32.totalorder %s166, %s169
      %p178 = scmp.eq.s32.totalorder %s36, 1
      %p179 = por %p177, %p178
      %p180 = scmp.ne.s32.totalorder %s169, %s170
      %p181 = scmp.eq.s32.totalorder %s36, 0
      %p182 = por %p180, %p181
      %p183 = scmp.ne.s32.totalorder %s169, %s170
      %p184 = scmp.eq.s32.totalorder %s37, 1
      %p185 = por %p183, %p184
      %p187 = scmp.ne.s32.totalorder %s170, %s186
      %p188 = scmp.eq.s32.totalorder %s37, 0
      %p189 = por %p187, %p188
      %s190 = ssub.s32 %s40, %s49
      %p191 = scmp.eq.s32.totalorder %s190, 0
      %s193 = sadd.s32 %s192, 1
      %s194 = scalar_select %p191, %s192, %s193
      %p197 = pneg %p191
      %p198 = scmp.eq.s32.totalorder %s31, 1
      %p199 = por %p197, %p198
      %p200 = scmp.ne.s32.totalorder %s192, %s195
      %p201 = scmp.eq.s32.totalorder %s31, 0
      %p202 = por %p200, %p201
      %p203 = scmp.ne.s32.totalorder %s192, %s195
      %p204 = scmp.eq.s32.totalorder %s36, 1
      %p205 = por %p203, %p204
      %p206 = scmp.ne.s32.totalorder %s195, %s196
      %p207 = scmp.eq.s32.totalorder %s36, 0
      %p208 = por %p206, %p207
      %p209 = scmp.ne.s32.totalorder %s195, %s196
      %p210 = scmp.eq.s32.totalorder %s37, 1
      %p211 = por %p209, %p210
      %p213 = scmp.ne.s32.totalorder %s196, %s212
      %p214 = scmp.eq.s32.totalorder %s37, 0
      %p215 = por %p213, %p214
      %s216 = ssub.s32 %s40, %s49
      %p217 = scmp.eq.s32.totalorder %s216, 0
      %s219 = sadd.s32 %s218, 1
      %s220 = scalar_select %p217, %s218, %s219
      %p223 = pneg %p217
      %p224 = scmp.eq.s32.totalorder %s31, 1
      %p225 = por %p223, %p224
      %p226 = scmp.ne.s32.totalorder %s218, %s221
      %p227 = scmp.eq.s32.totalorder %s31, 0
      %p228 = por %p226, %p227
      %p229 = scmp.ne.s32.totalorder %s218, %s221
      %p230 = scmp.eq.s32.totalorder %s36, 1
      %p231 = por %p229, %p230
      %p232 = scmp.ne.s32.totalorder %s221, %s222
      %p233 = scmp.eq.s32.totalorder %s36, 0
      %p234 = por %p232, %p233
      %p235 = scmp.ne.s32.totalorder %s221, %s222
      %p236 = scmp.eq.s32.totalorder %s37, 1
      %p237 = por %p235, %p236
      %p239 = scmp.ne.s32.totalorder %s222, %s238
      %p240 = scmp.eq.s32.totalorder %s37, 0
      %p241 = por %p239, %p240
      %s242 = ssub.s32 %s40, %s49
      %p243 = scmp.eq.s32.totalorder %s242, 0
      %s245 = sadd.s32 %s244, 1
      %s246 = scalar_select %p243, %s244, %s245
      %p249 = pneg %p243
      %p250 = scmp.eq.s32.totalorder %s31, 1
      %p251 = por %p249, %p250
      %p252 = scmp.ne.s32.totalorder %s244, %s247
      %p253 = scmp.eq.s32.totalorder %s31, 0
      %p254 = por %p252, %p253
      %p255 = scmp.ne.s32.totalorder %s244, %s247
      %p256 = scmp.eq.s32.totalorder %s36, 1
      %p257 = por %p255, %p256
      %p258 = scmp.ne.s32.totalorder %s247, %s248
      %p259 = scmp.eq.s32.totalorder %s36, 0
      %p260 = por %p258, %p259
      %p261 = scmp.ne.s32.totalorder %s247, %s248
      %p262 = scmp.eq.s32.totalorder %s37, 1
      %p263 = por %p261, %p262
      %p265 = scmp.ne.s32.totalorder %s248, %s264
      %p266 = scmp.eq.s32.totalorder %s37, 0
      %p267 = por %p265, %p266
      %s268 = ssub.s32 %s40, %s49
      %p269 = scmp.eq.s32.totalorder %s268, 0
      %s271 = sadd.s32 %s270, 1
      %s272 = scalar_select %p269, %s270, %s271
      %p275 = pneg %p269
      %p276 = scmp.eq.s32.totalorder %s31, 1
      %p277 = por %p275, %p276
      %p278 = scmp.ne.s32.totalorder %s270, %s273
      %p279 = scmp.eq.s32.totalorder %s31, 0
      %p280 = por %p278, %p279
      %p281 = scmp.ne.s32.totalorder %s270, %s273
      %p282 = scmp.eq.s32.totalorder %s36, 1
      %p283 = por %p281, %p282
      %p284 = scmp.ne.s32.totalorder %s273, %s274
      %p285 = scmp.eq.s32.totalorder %s36, 0
      %p286 = por %p284, %p285
      %p287 = scmp.ne.s32.totalorder %s273, %s274
      %p288 = scmp.eq.s32.totalorder %s37, 1
      %p289 = por %p287, %p288
      %p291 = scmp.ne.s32.totalorder %s274, %s290
      %p292 = scmp.eq.s32.totalorder %s37, 0
      %p293 = por %p291, %p292
      %s294 = ssub.s32 %s38, %s57
      %s295 = ssub.s32 %s39, %s53
      %s296 = sor.u32 %s294, %s295
      %s297 = ssub.s32 %s40, %s49
      %s298 = sor.u32 %s296, %s297
      %p299 = scmp.eq.s32.totalorder %s298, 0
      %s301 = sadd.s32 %s300, 1
      %s302 = scalar_select %p299, %s300, %s301
      %p305 = pneg %p299
      %p306 = scmp.eq.s32.totalorder %s31, 1
      %p307 = por %p305, %p306
      %p308 = scmp.ne.s32.totalorder %s300, %s303
      %p309 = scmp.eq.s32.totalorder %s31, 0
      %p310 = por %p308, %p309
      %p311 = scmp.ne.s32.totalorder %s300, %s303
      %p312 = scmp.eq.s32.totalorder %s36, 1
      %p313 = por %p311, %p312
      %p314 = scmp.ne.s32.totalorder %s303, %s304
      %p315 = scmp.eq.s32.totalorder %s36, 0
      %p316 = por %p314, %p315
      %p317 = scmp.ne.s32.totalorder %s303, %s304
      %p318 = scmp.eq.s32.totalorder %s37, 1
      %p319 = por %p317, %p318
      %p321 = scmp.ne.s32.totalorder %s304, %s320
      %p322 = scmp.eq.s32.totalorder %s37, 0
      %p323 = por %p321, %p322
      %s324 = ssub.s32 %s38, %s57
      %s325 = ssub.s32 %s39, %s53
      %s326 = sor.u32 %s324, %s325
      %s327 = ssub.s32 %s40, %s49
      %s328 = sor.u32 %s326, %s327
      %p329 = scmp.eq.s32.totalorder %s328, 0
      %s331 = sadd.s32 %s330, 1
      %s332 = scalar_select %p329, %s330, %s331
      %p335 = pneg %p329
      %p336 = scmp.eq.s32.totalorder %s31, 1
      %p337 = por %p335, %p336
      %p338 = scmp.ne.s32.totalorder %s330, %s333
      %p339 = scmp.eq.s32.totalorder %s31, 0
      %p340 = por %p338, %p339
      %p341 = scmp.ne.s32.totalorder %s330, %s333
      %p342 = scmp.eq.s32.totalorder %s36, 1
      %p343 = por %p341, %p342
      %p344 = scmp.ne.s32.totalorder %s333, %s334
      %p345 = scmp.eq.s32.totalorder %s36, 0
      %p346 = por %p344, %p345
      %p347 = scmp.ne.s32.totalorder %s333, %s334
      %p348 = scmp.eq.s32.totalorder %s37, 1
      %p349 = por %p347, %p348
      %p351 = scmp.ne.s32.totalorder %s334, %s350
      %p352 = scmp.eq.s32.totalorder %s37, 0
      %p353 = por %p351, %p352
      %s354 = ssub.s32 %s38, %s57
      %s355 = ssub.s32 %s39, %s53
      %s356 = sor.u32 %s354, %s355
      %s357 = ssub.s32 %s40, %s49
      %s358 = sor.u32 %s356, %s357
      %p359 = scmp.eq.s32.totalorder %s358, 0
      %s361 = sadd.s32 %s360, 1
      %s362 = scalar_select %p359, %s360, %s361
      %p365 = pneg %p359
      %p366 = scmp.eq.s32.totalorder %s31, 1
      %p367 = por %p365, %p366
      %p368 = scmp.ne.s32.totalorder %s360, %s363
      %p369 = scmp.eq.s32.totalorder %s31, 0
      %p370 = por %p368, %p369
      %p371 = scmp.ne.s32.totalorder %s360, %s363
      %p372 = scmp.eq.s32.totalorder %s36, 1
      %p373 = por %p371, %p372
      %p374 = scmp.ne.s32.totalorder %s363, %s364
      %p375 = scmp.eq.s32.totalorder %s36, 0
      %p376 = por %p374, %p375
      %p377 = scmp.ne.s32.totalorder %s363, %s364
      %p378 = scmp.eq.s32.totalorder %s37, 1
      %p379 = por %p377, %p378
      %p381 = scmp.ne.s32.totalorder %s364, %s380
      %p382 = scmp.eq.s32.totalorder %s37, 0
      %p383 = por %p381, %p382
      %p384 = scmp.le.s32.totalorder 1, %s31
      %p385 = scmp.lt.s32.totalorder %s31, 3
      %p386 = pnand %p384, %p385
      %p387 = pneg %p386
      // Predicated region
      $region9: #{tpu_custom_call.1} parent=5 // pred_check
        _
      $region10: #{tpu_custom_call.1} parent=5 // pred_check_branch
        %389 = sbr.rel (%p386) target = $region12
      $region11: #{tpu_custom_call.1} parent=5 // pred_region
        %s390 = ssub.s32 %s31, 1
        // Predicated region
        $region13: #{tpu_custom_call.1} parent=11 // pred_check
          %p391 = pneg %p156
        $region14: #{tpu_custom_call.1} parent=11 // pred_check_branch
          %393 = sbr.rel (%p391) target = $region16
        $region15: #{tpu_custom_call.1} parent=11 // pred_region
          %s395 = ssub.s32 512, 512
          %396 = vsyncadd [#allocation6], %s395
          %s397 = smul.addr %s43, 128
          %s398 = scalar_lea.hbm %s3, %s397
          %s399 = sshll.u32 [#allocation7], 4
          %s400 = int_to_ptr.vmem [resolvable:$true] %s399
          %405 = dma.hbm_to_vmem [thread:$0]  %s398, 512, %s400, [#allocation6], 128, 128, 8
        $region16: #{tpu_custom_call.1} parent=11 // pred_fallthru
          _
        // Predicated region
        $region17: #{tpu_custom_call.1} parent=11 // pred_check
          %p406 = pneg %p182
        $region18: #{tpu_custom_call.1} parent=11 // pred_check_branch
          %408 = sbr.rel (%p406) target = $region20
        $region19: #{tpu_custom_call.1} parent=11 // pred_region
          %s410 = ssub.s32 512, 512
          %411 = vsyncadd [#allocation9], %s410
          %s412 = smul.addr %s43, 128
          %s413 = scalar_lea.hbm %s4, %s412
          %s414 = sshll.u32 [#allocation8], 4
          %s415 = int_to_ptr.vmem [resolvable:$true] %s414
          %420 = dma.hbm_to_vmem [thread:$0]  %s413, 512, %s415, [#allocation9], 128, 128, 8
        $region20: #{tpu_custom_call.1} parent=11 // pred_fallthru
          _
        // Predicated region
        $region21: #{tpu_custom_call.1} parent=11 // pred_check
          %p421 = pneg %p208
        $region22: #{tpu_custom_call.1} parent=11 // pred_check_branch
          %423 = sbr.rel (%p421) target = $region24
        $region23: #{tpu_custom_call.1} parent=11 // pred_region
          %s425 = ssub.s32 512, 512
          %426 = vsyncadd [#allocation9], %s425
          %s427 = smul.addr %s43, 128
          %s428 = scalar_lea.hbm %s5, %s427
          %s429 = sshll.u32 [#allocation10], 4
          %s430 = int_to_ptr.vmem [resolvable:$true] %s429
          %435 = dma.hbm_to_vmem [thread:$0]  %s428, 512, %s430, [#allocation9], 128, 128, 8
        $region24: #{tpu_custom_call.1} parent=11 // pred_fallthru
          _
        // Predicated region
        $region25: #{tpu_custom_call.1} parent=11 // pred_check
          %p436 = pneg %p234
        $region26: #{tpu_custom_call.1} parent=11 // pred_check_branch
          %438 = sbr.rel (%p436) target = $region28
        $region27: #{tpu_custom_call.1} parent=11 // pred_region
          %p439 = scmp.lt.s32.totalorder %s43, 0
          %s440 = scalar_select %p439, %s43, 0
          %s441 = scalar_lea.vmem %s6, %s440
        $region28: #{tpu_custom_call.1} parent=11 // pred_fallthru
          _
        // Predicated region
        $region29: #{tpu_custom_call.1} parent=11 // pred_check
          %p442 = pneg %p260
        $region30: #{tpu_custom_call.1} parent=11 // pred_check_branch
          %444 = sbr.rel (%p442) target = $region32
        $region31: #{tpu_custom_call.1} parent=11 // pred_region
          %p445 = scmp.lt.s32.totalorder %s43, 0
          %s446 = scalar_select %p445, %s43, 0
          %s447 = scalar_lea.vmem %s7, %s446
        $region32: #{tpu_custom_call.1} parent=11 // pred_fallthru
          _
        // Predicated region
        $region33: #{tpu_custom_call.1} parent=11 // pred_check
          %p448 = pneg %p286
        $region34: #{tpu_custom_call.1} parent=11 // pred_check_branch
          %450 = sbr.rel (%p448) target = $region36
        $region35: #{tpu_custom_call.1} parent=11 // pred_region
          %p451 = scmp.lt.s32.totalorder %s43, 0
          %s452 = scalar_select %p451, %s43, 0
          %s453 = scalar_lea.vmem %s8, %s452
        $region36: #{tpu_custom_call.1} parent=11 // pred_fallthru
          _
      $region12: #{tpu_custom_call.1} parent=5 // pred_fallthru
        _
      %p454 = scmp.lt.s32.totalorder %s31, 2
      // Predicated region
      $region37: #{tpu_custom_call.1} parent=5 // pred_check
        %p455 = pneg %p454
      $region38: #{tpu_custom_call.1} parent=5 // pred_check_branch
        %457 = sbr.rel (%p455) target = $region40
      $region39: #{tpu_custom_call.1} parent=5 // pred_region
        // Predicated region
        $region41: #{tpu_custom_call.1} parent=39 // pred_check
          %p458 = pneg %p72
        $region42: #{tpu_custom_call.1} parent=39 // pred_check_branch
          %460 = sbr.rel (%p458) target = $region44
        $region43: #{tpu_custom_call.1} parent=39 // pred_region
          %s461 = sand.u32 %s62, 1
          %s462 = scalar_lea.sflag [#allocation3], %s461
          %s463 = sand.u32 %s62, 1
          %s464 = smul.addr %s463, 8
          %s465 = scalar_lea.vmem [#allocation2], %s464
          %s467 = ssub.s32 128, 128
          %468 = vsyncadd %s462, %s467
          %s469 = sadd.s32 %s39, %s38
          %s470 = smul.addr %s469, 128
          %s471 = scalar_lea.hbm %s0, %s470
          %s473 = sshll.u32 %s465, 4
          %s474 = int_to_ptr.vmem [resolvable:$true] %s473
          %476 = dma.hbm_to_vmem [thread:$0]  %s471, 128, %s474, %s462
        $region44: #{tpu_custom_call.1} parent=39 // pred_fallthru
          _
        // Predicated region
        $region45: #{tpu_custom_call.1} parent=39 // pred_check
          %p477 = pneg %p98
        $region46: #{tpu_custom_call.1} parent=39 // pred_check_branch
          %479 = sbr.rel (%p477) target = $region48
        $region47: #{tpu_custom_call.1} parent=39 // pred_region
          %s480 = sand.u32 %s31, 1
          %s481 = scalar_lea.sflag [#allocation6], %s480
          %s482 = sand.u32 %s88, 1
          %s483 = scalar_lea.vmem [#allocation5], %s482
          %s485 = ssub.s32 16, 16
          %486 = vsyncadd %s481, %s485
          %s487 = smul.addr %s38, 16
          %s488 = scalar_lea.hbm %s1, %s487
          %s490 = sshll.u32 %s483, 4
          %s491 = int_to_ptr.vmem [resolvable:$true] %s490
          %493 = dma.hbm_to_vmem [thread:$0]  %s488, 16, %s491, %s481
        $region48: #{tpu_custom_call.1} parent=39 // pred_fallthru
          _
        // Predicated region
        $region49: #{tpu_custom_call.1} parent=39 // pred_check
          %p494 = pneg %p124
        $region50: #{tpu_custom_call.1} parent=39 // pred_check_branch
          %496 = sbr.rel (%p494) target = $region52
        $region51: #{tpu_custom_call.1} parent=39 // pred_region
          %p497 = scmp.lt.s32.totalorder %s38, 1
          %s498 = scalar_select %p497, %s38, 1
          %s499 = scalar_lea.vmem %s2, %s498
        $region52: #{tpu_custom_call.1} parent=39 // pred_fallthru
          _
      $region40: #{tpu_custom_call.1} parent=5 // pred_fallthru
        _
      %p500 = scmp.le.s32.totalorder 1, %s31
      %p501 = scmp.lt.s32.totalorder %s31, 3
      %p502 = pnand %p500, %p501
      %p503 = pneg %p502
      // Predicated region
      $region53: #{tpu_custom_call.1} parent=5 // pred_check
        _
      $region54: #{tpu_custom_call.1} parent=5 // pred_check_branch
        %505 = sbr.rel (%p502) target = $region56
      $region55: #{tpu_custom_call.1} parent=5 // pred_region
        %s506 = ssub.s32 %s31, 1
        %s507 = sand.u32 %s65, 1
        %s508 = scalar_lea.sflag [#allocation3], %s507
        %s509 = sand.u32 %s65, 1
        %s510 = smul.addr %s509, 8
        %s511 = scalar_lea.vmem [#allocation2], %s510
        // Predicated region
        $region57: #{tpu_custom_call.1} parent=55 // pred_check
          %p512 = pneg %p78
        $region58: #{tpu_custom_call.1} parent=55 // pred_check_branch
          %514 = sbr.rel (%p512) target = $region60
        $region59: #{tpu_custom_call.1} parent=55 // pred_region
          %515 = dma.done %s508, 128
        $region60: #{tpu_custom_call.1} parent=55 // pred_fallthru
          _
        %s516 = sand.u32 %s36, 1
        %s517 = scalar_lea.sflag [#allocation6], %s516
        %s518 = sand.u32 %s91, 1
        %s519 = scalar_lea.vmem [#allocation5], %s518
        // Predicated region
        $region61: #{tpu_custom_call.1} parent=55 // pred_check
          %p520 = pneg %p104
        $region62: #{tpu_custom_call.1} parent=55 // pred_check_branch
          %522 = sbr.rel (%p520) target = $region64
        $region63: #{tpu_custom_call.1} parent=55 // pred_region
          %523 = dma.done %s517, 16
        $region64: #{tpu_custom_call.1} parent=55 // pred_fallthru
          _
        // Predicated region
        $region65: #{tpu_custom_call.1} parent=55 // pred_check
          %p524 = pneg %p156
        $region66: #{tpu_custom_call.1} parent=55 // pred_check_branch
          %526 = sbr.rel (%p524) target = $region68
        $region67: #{tpu_custom_call.1} parent=55 // pred_region
          %527 = dma.done [#allocation6], 512
        $region68: #{tpu_custom_call.1} parent=55 // pred_fallthru
          _
        // Predicated region
        $region69: #{tpu_custom_call.1} parent=55 // pred_check
          %p528 = pneg %p182
        $region70: #{tpu_custom_call.1} parent=55 // pred_check_branch
          %530 = sbr.rel (%p528) target = $region72
        $region71: #{tpu_custom_call.1} parent=55 // pred_region
          %531 = dma.done [#allocation9], 512
        $region72: #{tpu_custom_call.1} parent=55 // pred_fallthru
          _
        // Predicated region
        $region73: #{tpu_custom_call.1} parent=55 // pred_check
          %p532 = pneg %p208
        $region74: #{tpu_custom_call.1} parent=55 // pred_check_branch
          %534 = sbr.rel (%p532) target = $region76
        $region75: #{tpu_custom_call.1} parent=55 // pred_region
          %535 = dma.done [#allocation9], 512
        $region76: #{tpu_custom_call.1} parent=55 // pred_fallthru
          _
        %s536 = sand.u32 %s65, 1
        %s537 = scalar_lea.sflag [#allocation3], %s536
        %s538 = sand.u32 %s65, 1
        %s539 = smul.addr %s538, 8
        %s540 = scalar_lea.vmem [#allocation2], %s539
        %p541 = pneg %p78
        %p542 = pneg %p75
        %s543 = sand.u32 %s36, 1
        %s544 = scalar_lea.sflag [#allocation6], %s543
        %s545 = sand.u32 %s91, 1
        %s546 = scalar_lea.vmem [#allocation5], %s545
        %p547 = pneg %p104
        %p548 = pneg %p101
        %p549 = scmp.lt.s32.totalorder %s41, 1
        %s550 = scalar_select %p549, %s41, 1
        %s551 = scalar_lea.vmem %s2, %s550
        %p552 = pneg %p130
        %p553 = pneg %p127
        %p554 = pneg %p156
        %p555 = pneg %p153
        %p556 = pneg %p182
        %p557 = pneg %p179
        %p558 = pneg %p208
        %p559 = pneg %p205
        %p560 = scmp.lt.s32.totalorder %s43, 0
        %s561 = scalar_select %p560, %s43, 0
        %s562 = scalar_lea.vmem %s6, %s561
        %p563 = pneg %p234
        %p564 = pneg %p231
        %p565 = scmp.lt.s32.totalorder %s43, 0
        %s566 = scalar_select %p565, %s43, 0
        %s567 = scalar_lea.vmem %s7, %s566
        %p568 = pneg %p260
        %p569 = pneg %p257
        %p570 = scmp.lt.s32.totalorder %s43, 0
        %s571 = scalar_select %p570, %s43, 0
        %s572 = scalar_lea.vmem %s8, %s571
        %p573 = pneg %p286
        %p574 = pneg %p283
        %p575 = pneg %p316
        %p576 = pneg %p313
        %s577 = sand.u32 %s303, 1
        %s578 = scalar_lea.sflag [#allocation4], %s577
        %s579 = sand.u32 %s303, 1
        %s580 = smul.addr %s579, 8
        %s581 = scalar_lea.vmem [#allocation11], %s580
        %p582 = pneg %p346
        %p583 = pneg %p343
        %s584 = sand.u32 %s36, 1
        %s585 = scalar_lea.sflag [#allocation13], %s584
        %s586 = sand.u32 %s333, 1
        %s587 = smul.addr %s586, 8
        %s588 = scalar_lea.vmem [#allocation12], %s587
        %p589 = pneg %p376
        %p590 = pneg %p373
        %s591 = sand.u32 %s36, 1
        %s592 = scalar_lea.sflag [#allocation13], %s591
        %s593 = sand.u32 %s363, 1
        %s594 = smul.addr %s593, 8
        %s595 = scalar_lea.vmem [#allocation14], %s594
        %p596 = scmp.lt.s32.totalorder %s41, 1
        %s597 = scalar_select %p596, %s41, 1
        %s598 = scalar_lea.vmem %s2, %s597
        %p599 = scmp.lt.s32.totalorder %s43, 0
        %s600 = scalar_select %p599, %s43, 0
        %s601 = scalar_lea.vmem %s6, %s600
        %p602 = scmp.lt.s32.totalorder %s43, 0
        %s603 = scalar_select %p602, %s43, 0
        %s604 = scalar_lea.vmem %s7, %s603
        %p605 = scmp.lt.s32.totalorder %s43, 0
        %s606 = scalar_select %p605, %s43, 0
        %s607 = scalar_lea.vmem %s8, %s606
        %v608 = vld [vmem:[%s511] sm:$0xff]
        %vm609 = vcmask 261120
        %v610 = vsel %vm609, %v608, 0.0
        %611 = vadd.xlane.f32.xlu0 %v610
        %v612 = vpop.xlane.xlu0 %611
        %v613 = vrcp.pop 32.0
        %v614 = vmul.f32 %v612, %v613
        %v615 = vsub.f32 %v608, %v614
        %v616 = vmul.f32 %v615, %v615
        %v617 = vsel %vm609, %v616, 0.0
        %618 = vadd.xlane.f32.xlu0 %v617
        %v619 = vpop.xlane.xlu0 %618
        %v620 = vmul.f32 %v619, %v613
        %v621 = vadd.f32 %v620, 1e-06
        %v622 = vrsqrt.pop %v621
        %v623 = vmul.f32 %v615, %v622
        %v624 = vld [vmem:[%s519] sm:$0x1]
        %v625 = vadd.f32 %v624, 1.0
        %v627 = vlaneseq
        %v628 = vshrl.u32 %v627, 7
        %v629 = vsub.s32 0, %v628
        %v630 = vrot.slane %v625, %v629
        %v632 = vmul.f32 %v623, %v630
        %v633 = vld [vmem:[%s598] sm:$0x1]
        %v635 = vlaneseq
        %v636 = vshrl.u32 %v635, 7
        %v637 = vsub.s32 0, %v636
        %v638 = vrot.slane %v633, %v637
        %v640 = vadd.f32 %v632, %v638
        %v641 = vld [vmem:[#allocation7] sm:$0xff]
        %v642 = vld [vmem:[#allocation7 + $0x8] sm:$0xff]
        %v643 = vld [vmem:[#allocation7 + $0x10] sm:$0xff]
        %v644 = vld [vmem:[#allocation7 + $0x18] sm:$0xff]
        %v645 = vld [vmem:[%s601] sm:$0x1]
        %v647 = vlaneseq
        %v648 = vshrl.u32 %v647, 7
        %v649 = vsub.s32 0, %v648
        %v650 = vrot.slane %v645, %v649
        %v653 = vsel %vm609, %v640, 0
        %655 = vmatprep.subr.mxu0 0.0
        %656 = vmatpush1.msra.mxu0 0.0
        %657 = vmatprep.subr.mxu0 0.0
        %658 = vmatpush1.msra.mxu0 0.0
        %659 = vmatprep.subr.mxu0 0.0
        %660 = vmatpush1.msra.mxu0 0.0
        %661 = vmatprep.subr.mxu0 0.0
        %662 = vmatpush1.msra.mxu0 0.0
        %663 = vmatprep.subr.mxu0 0.0
        %664 = vmatpush1.msra.mxu0 0.0
        %665 = vmatprep.subr.mxu0 0.0
        %666 = vmatpush1.msra.mxu0 0.0
        %667 = vmatprep.subr.mxu0 0.0
        %668 = vmatpush1.msra.mxu0 0.0
        %669 = vmatprep.subr.mxu0 0.0
        %670 = vmatpush1.msra.mxu0 0.0
        %671 = vmatprep.subr.mxu0 0.0
        %672 = vmatpush1.msra.mxu0 0.0
        %673 = vmatprep.subr.mxu0 0.0
        %674 = vmatpush1.msra.mxu0 0.0
        %675 = vmatprep.subr.mxu0 0.0
        %676 = vmatpush1.msra.mxu0 0.0
        %677 = vmatprep.subr.mxu0 0.0
        %678 = vmatpush1.msra.mxu0 0.0
        %679 = vmatprep.subr.mxu0 0.0
        %680 = vmatpush1.msra.mxu0 %v644
        %681 = vmatprep.subr.mxu0 0.0
        %682 = vmatpush1.msra.mxu0 %v643
        %683 = vmatprep.subr.mxu0 0.0
        %684 = vmatpush1.msra.mxu0 %v642
        %685 = vmatprep.subr.mxu0 0.0
        %686 = vmatpush1.msra.mxu0 %v641
        %687 = vmatprep.subr.mxu0 0.0
        %688 = vmatpush2.msra.mxu0 0.0
        %689 = vmatprep.subr.mxu0 0.0
        %690 = vmatpush2.msra.mxu0 0.0
        %691 = vmatprep.subr.mxu0 0.0
        %692 = vmatpush2.msra.mxu0 0.0
        %693 = vmatprep.subr.mxu0 0.0
        %694 = vmatpush2.msra.mxu0 0.0
        %695 = vmatprep.subr.mxu0 0.0
        %696 = vmatpush2.msra.mxu0 0.0
        %697 = vmatprep.subr.mxu0 0.0
        %698 = vmatpush2.msra.mxu0 0.0
        %699 = vmatprep.subr.mxu0 0.0
        %700 = vmatpush2.msra.mxu0 0.0
        %701 = vmatprep.subr.mxu0 0.0
        %702 = vmatpush2.msra.mxu0 0.0
        %703 = vmatprep.subr.mxu0 0.0
        %704 = vmatpush2.msra.mxu0 0.0
        %705 = vmatprep.subr.mxu0 0.0
        %706 = vmatpush2.msra.mxu0 0.0
        %707 = vmatprep.subr.mxu0 0.0
        %708 = vmatpush2.msra.mxu0 0.0
        %709 = vmatprep.subr.mxu0 0.0
        %710 = vmatpush2.msra.mxu0 0.0
        %711 = vmatprep.subr.mxu0 0.0
        %712 = vmatpush2.msra.mxu0 0.0
        %713 = vmatprep.subr.mxu0 0.0
        %714 = vmatpush2.msra.mxu0 0.0
        %715 = vmatprep.subr.mxu0 0.0
        %716 = vmatpush2.msra.mxu0 0.0
        %717 = vmatprep.subr.mxu0 0.0
        %718 = vmatpush2.msra.mxu0 0.0
        %719 = vmatprep.mubr.f32.mxu0 0.0
        %720 = vmatmul.mubr.f32.gmra.mxu0 %v653
        %v721 = vpop.f32.mrf.mxu0
        %v722 = vadd.f32 %v650, %v721
        %v723 = vpop.f32.mrf.mxu0
        %724 = vdwg.mxu0
        %725 = vst.msk [vmem:[%s581] sm:$0xff] %vm609, %v722
        %v726 = vld [vmem:[#allocation8] sm:$0xff]
        %v727 = vld [vmem:[#allocation8 + $0x8] sm:$0xff]
        %v728 = vld [vmem:[#allocation8 + $0x10] sm:$0xff]
        %v729 = vld [vmem:[#allocation8 + $0x18] sm:$0xff]
        %v730 = vld [vmem:[%s604] sm:$0x1]
        %v732 = vlaneseq
        %v733 = vshrl.u32 %v732, 7
        %v734 = vsub.s32 0, %v733
        %v735 = vrot.slane %v730, %v734
        %737 = vmatprep.subr.mxu0 0.0
        %738 = vmatpush1.msra.mxu0 0.0
        %739 = vmatprep.subr.mxu0 0.0
        %740 = vmatpush1.msra.mxu0 0.0
        %741 = vmatprep.subr.mxu0 0.0
        %742 = vmatpush1.msra.mxu0 0.0
        %743 = vmatprep.subr.mxu0 0.0
        %744 = vmatpush1.msra.mxu0 0.0
        %745 = vmatprep.subr.mxu0 0.0
        %746 = vmatpush1.msra.mxu0 0.0
        %747 = vmatprep.subr.mxu0 0.0
        %748 = vmatpush1.msra.mxu0 0.0
        %749 = vmatprep.subr.mxu0 0.0
        %750 = vmatpush1.msra.mxu0 0.0
        %751 = vmatprep.subr.mxu0 0.0
        %752 = vmatpush1.msra.mxu0 0.0
        %753 = vmatprep.subr.mxu0 0.0
        %754 = vmatpush1.msra.mxu0 0.0
        %755 = vmatprep.subr.mxu0 0.0
        %756 = vmatpush1.msra.mxu0 0.0
        %757 = vmatprep.subr.mxu0 0.0
        %758 = vmatpush1.msra.mxu0 0.0
        %759 = vmatprep.subr.mxu0 0.0
        %760 = vmatpush1.msra.mxu0 0.0
        %761 = vmatprep.subr.mxu0 0.0
        %762 = vmatpush1.msra.mxu0 %v729
        %763 = vmatprep.subr.mxu0 0.0
        %764 = vmatpush1.msra.mxu0 %v728
        %765 = vmatprep.subr.mxu0 0.0
        %766 = vmatpush1.msra.mxu0 %v727
        %767 = vmatprep.subr.mxu0 0.0
        %768 = vmatpush1.msra.mxu0 %v726
        %769 = vmatprep.subr.mxu0 0.0
        %770 = vmatpush2.msra.mxu0 0.0
        %771 = vmatprep.subr.mxu0 0.0
        %772 = vmatpush2.msra.mxu0 0.0
        %773 = vmatprep.subr.mxu0 0.0
        %774 = vmatpush2.msra.mxu0 0.0
        %775 = vmatprep.subr.mxu0 0.0
        %776 = vmatpush2.msra.mxu0 0.0
        %777 = vmatprep.subr.mxu0 0.0
        %778 = vmatpush2.msra.mxu0 0.0
        %779 = vmatprep.subr.mxu0 0.0
        %780 = vmatpush2.msra.mxu0 0.0
        %781 = vmatprep.subr.mxu0 0.0
        %782 = vmatpush2.msra.mxu0 0.0
        %783 = vmatprep.subr.mxu0 0.0
        %784 = vmatpush2.msra.mxu0 0.0
        %785 = vmatprep.subr.mxu0 0.0
        %786 = vmatpush2.msra.mxu0 0.0
        %787 = vmatprep.subr.mxu0 0.0
        %788 = vmatpush2.msra.mxu0 0.0
        %789 = vmatprep.subr.mxu0 0.0
        %790 = vmatpush2.msra.mxu0 0.0
        %791 = vmatprep.subr.mxu0 0.0
        %792 = vmatpush2.msra.mxu0 0.0
        %793 = vmatprep.subr.mxu0 0.0
        %794 = vmatpush2.msra.mxu0 0.0
        %795 = vmatprep.subr.mxu0 0.0
        %796 = vmatpush2.msra.mxu0 0.0
        %797 = vmatprep.subr.mxu0 0.0
        %798 = vmatpush2.msra.mxu0 0.0
        %799 = vmatprep.subr.mxu0 0.0
        %800 = vmatpush2.msra.mxu0 0.0
        %801 = vmatprep.mubr.f32.mxu0 0.0
        %802 = vmatmul.mubr.f32.gmra.mxu0 %v653
        %v803 = vpop.f32.mrf.mxu0
        %v804 = vadd.f32 %v735, %v803
        %v805 = vpop.f32.mrf.mxu0
        %806 = vdwg.mxu0
        %807 = vst.msk [vmem:[%s588] sm:$0xff] %vm609, %v804
        %v808 = vld [vmem:[#allocation10] sm:$0xff]
        %v809 = vld [vmem:[#allocation10 + $0x8] sm:$0xff]
        %v810 = vld [vmem:[#allocation10 + $0x10] sm:$0xff]
        %v811 = vld [vmem:[#allocation10 + $0x18] sm:$0xff]
        %v812 = vld [vmem:[%s607] sm:$0x1]
        %v814 = vlaneseq
        %v815 = vshrl.u32 %v814, 7
        %v816 = vsub.s32 0, %v815
        %v817 = vrot.slane %v812, %v816
        %819 = vmatprep.subr.mxu0 0.0
        %820 = vmatpush1.msra.mxu0 0.0
        %821 = vmatprep.subr.mxu0 0.0
        %822 = vmatpush1.msra.mxu0 0.0
        %823 = vmatprep.subr.mxu0 0.0
        %824 = vmatpush1.msra.mxu0 0.0
        %825 = vmatprep.subr.mxu0 0.0
        %826 = vmatpush1.msra.mxu0 0.0
        %827 = vmatprep.subr.mxu0 0.0
        %828 = vmatpush1.msra.mxu0 0.0
        %829 = vmatprep.subr.mxu0 0.0
        %830 = vmatpush1.msra.mxu0 0.0
        %831 = vmatprep.subr.mxu0 0.0
        %832 = vmatpush1.msra.mxu0 0.0
        %833 = vmatprep.subr.mxu0 0.0
        %834 = vmatpush1.msra.mxu0 0.0
        %835 = vmatprep.subr.mxu0 0.0
        %836 = vmatpush1.msra.mxu0 0.0
        %837 = vmatprep.subr.mxu0 0.0
        %838 = vmatpush1.msra.mxu0 0.0
        %839 = vmatprep.subr.mxu0 0.0
        %840 = vmatpush1.msra.mxu0 0.0
        %841 = vmatprep.subr.mxu0 0.0
        %842 = vmatpush1.msra.mxu0 0.0
        %843 = vmatprep.subr.mxu0 0.0
        %844 = vmatpush1.msra.mxu0 %v811
        %845 = vmatprep.subr.mxu0 0.0
        %846 = vmatpush1.msra.mxu0 %v810
        %847 = vmatprep.subr.mxu0 0.0
        %848 = vmatpush1.msra.mxu0 %v809
        %849 = vmatprep.subr.mxu0 0.0
        %850 = vmatpush1.msra.mxu0 %v808
        %851 = vmatprep.subr.mxu0 0.0
        %852 = vmatpush2.msra.mxu0 0.0
        %853 = vmatprep.subr.mxu0 0.0
        %854 = vmatpush2.msra.mxu0 0.0
        %855 = vmatprep.subr.mxu0 0.0
        %856 = vmatpush2.msra.mxu0 0.0
        %857 = vmatprep.subr.mxu0 0.0
        %858 = vmatpush2.msra.mxu0 0.0
        %859 = vmatprep.subr.mxu0 0.0
        %860 = vmatpush2.msra.mxu0 0.0
        %861 = vmatprep.subr.mxu0 0.0
        %862 = vmatpush2.msra.mxu0 0.0
        %863 = vmatprep.subr.mxu0 0.0
        %864 = vmatpush2.msra.mxu0 0.0
        %865 = vmatprep.subr.mxu0 0.0
        %866 = vmatpush2.msra.mxu0 0.0
        %867 = vmatprep.subr.mxu0 0.0
        %868 = vmatpush2.msra.mxu0 0.0
        %869 = vmatprep.subr.mxu0 0.0
        %870 = vmatpush2.msra.mxu0 0.0
        %871 = vmatprep.subr.mxu0 0.0
        %872 = vmatpush2.msra.mxu0 0.0
        %873 = vmatprep.subr.mxu0 0.0
        %874 = vmatpush2.msra.mxu0 0.0
        %875 = vmatprep.subr.mxu0 0.0
        %876 = vmatpush2.msra.mxu0 0.0
        %877 = vmatprep.subr.mxu0 0.0
        %878 = vmatpush2.msra.mxu0 0.0
        %879 = vmatprep.subr.mxu0 0.0
        %880 = vmatpush2.msra.mxu0 0.0
        %881 = vmatprep.subr.mxu0 0.0
        %882 = vmatpush2.msra.mxu0 0.0
        %883 = vmatprep.mubr.f32.mxu0 0.0
        %884 = vmatmul.mubr.f32.gmra.mxu0 %v653
        %v885 = vpop.f32.mrf.mxu0
        %v886 = vadd.f32 %v817, %v885
        %v887 = vpop.f32.mrf.mxu0
        %888 = vdwg.mxu0
        %889 = vst.msk [vmem:[%s595] sm:$0xff] %vm609, %v886
        %s890 = sand.u32 %s303, 1
        %s891 = scalar_lea.sflag [#allocation4], %s890
        %s892 = sand.u32 %s303, 1
        %s893 = smul.addr %s892, 8
        %s894 = scalar_lea.vmem [#allocation11], %s893
        %s895 = sand.u32 %s36, 1
        %s896 = scalar_lea.sflag [#allocation13], %s895
        %s897 = sand.u32 %s333, 1
        %s898 = smul.addr %s897, 8
        %s899 = scalar_lea.vmem [#allocation12], %s898
        %s900 = sand.u32 %s36, 1
        %s901 = scalar_lea.sflag [#allocation13], %s900
        %s902 = sand.u32 %s363, 1
        %s903 = smul.addr %s902, 8
        %s904 = scalar_lea.vmem [#allocation14], %s903
        // Predicated region
        $region77: #{tpu_custom_call.1} parent=55 // pred_check
          %p905 = pneg %p313
        $region78: #{tpu_custom_call.1} parent=55 // pred_check_branch
          %907 = sbr.rel (%p905) target = $region80
        $region79: #{tpu_custom_call.1} parent=55 // pred_region
          %s909 = ssub.s32 128, 128
          %910 = vsyncadd %s891, %s909
          %s911 = sadd.s32 %s43, %s42
          %s912 = sadd.s32 %s911, %s41
          %s913 = smul.addr %s912, 128
          %s914 = scalar_lea.hbm %s9, %s913
          %s916 = sshll.u32 %s894, 4
          %s917 = int_to_ptr.vmem [resolvable:$true] %s916
          %919 = dma.vmem_to_hbm [thread:$0]  %s917, 128, %s914, %s891
        $region80: #{tpu_custom_call.1} parent=55 // pred_fallthru
          _
        // Predicated region
        $region81: #{tpu_custom_call.1} parent=55 // pred_check
          %p920 = pneg %p343
        $region82: #{tpu_custom_call.1} parent=55 // pred_check_branch
          %922 = sbr.rel (%p920) target = $region84
        $region83: #{tpu_custom_call.1} parent=55 // pred_region
          %s924 = ssub.s32 128, 128
          %925 = vsyncadd %s896, %s924
          %s926 = sadd.s32 %s43, %s42
          %s927 = sadd.s32 %s926, %s41
          %s928 = smul.addr %s927, 128
          %s929 = scalar_lea.hbm %s10, %s928
          %s931 = sshll.u32 %s899, 4
          %s932 = int_to_ptr.vmem [resolvable:$true] %s931
          %934 = dma.vmem_to_hbm [thread:$0]  %s932, 128, %s929, %s896
        $region84: #{tpu_custom_call.1} parent=55 // pred_fallthru
          _
        // Predicated region
        $region85: #{tpu_custom_call.1} parent=55 // pred_check
          %p935 = pneg %p373
        $region86: #{tpu_custom_call.1} parent=55 // pred_check_branch
          %937 = sbr.rel (%p935) target = $region88
        $region87: #{tpu_custom_call.1} parent=55 // pred_region
          %s939 = ssub.s32 128, 128
          %940 = vsyncadd %s901, %s939
          %s941 = sadd.s32 %s43, %s42
          %s942 = sadd.s32 %s941, %s41
          %s943 = smul.addr %s942, 128
          %s944 = scalar_lea.hbm %s11, %s943
          %s946 = sshll.u32 %s904, 4
          %s947 = int_to_ptr.vmem [resolvable:$true] %s946
          %949 = dma.vmem_to_hbm [thread:$0]  %s947, 128, %s944, %s901
        $region88: #{tpu_custom_call.1} parent=55 // pred_fallthru
          _
      $region56: #{tpu_custom_call.1} parent=5 // pred_fallthru
        _
      %p950 = scmp.le.s32.totalorder 2, %s31
      // Predicated region
      $region89: #{tpu_custom_call.1} parent=5 // pred_check
        %p951 = pneg %p950
      $region90: #{tpu_custom_call.1} parent=5 // pred_check_branch
        %953 = sbr.rel (%p951) target = $region92
      $region91: #{tpu_custom_call.1} parent=5 // pred_region
        %s954 = ssub.s32 %s31, 2
        // Predicated region
        $region93: #{tpu_custom_call.1} parent=91 // pred_check
          %p955 = pneg %p319
        $region94: #{tpu_custom_call.1} parent=91 // pred_check_branch
          %957 = sbr.rel (%p955) target = $region96
        $region95: #{tpu_custom_call.1} parent=91 // pred_region
          %s958 = sand.u32 %s304, 1
          %s959 = scalar_lea.sflag [#allocation4], %s958
          %s960 = sand.u32 %s304, 1
          %s961 = smul.addr %s960, 8
          %s962 = scalar_lea.vmem [#allocation11], %s961
          %963 = dma.done %s959, 128
        $region96: #{tpu_custom_call.1} parent=91 // pred_fallthru
          _
        // Predicated region
        $region97: #{tpu_custom_call.1} parent=91 // pred_check
          %p964 = pneg %p349
        $region98: #{tpu_custom_call.1} parent=91 // pred_check_branch
          %966 = sbr.rel (%p964) target = $region100
        $region99: #{tpu_custom_call.1} parent=91 // pred_region
          %s967 = sand.u32 %s37, 1
          %s968 = scalar_lea.sflag [#allocation13], %s967
          %s969 = sand.u32 %s334, 1
          %s970 = smul.addr %s969, 8
          %s971 = scalar_lea.vmem [#allocation12], %s970
          %972 = dma.done %s968, 128
        $region100: #{tpu_custom_call.1} parent=91 // pred_fallthru
          _
        // Predicated region
        $region101: #{tpu_custom_call.1} parent=91 // pred_check
          %p973 = pneg %p379
        $region102: #{tpu_custom_call.1} parent=91 // pred_check_branch
          %975 = sbr.rel (%p973) target = $region104
        $region103: #{tpu_custom_call.1} parent=91 // pred_region
          %s976 = sand.u32 %s37, 1
          %s977 = scalar_lea.sflag [#allocation13], %s976
          %s978 = sand.u32 %s364, 1
          %s979 = smul.addr %s978, 8
          %s980 = scalar_lea.vmem [#allocation14], %s979
          %981 = dma.done %s977, 128
        $region104: #{tpu_custom_call.1} parent=91 // pred_fallthru
          _
      $region92: #{tpu_custom_call.1} parent=5 // pred_fallthru
        _
    $region6: #{tpu_custom_call.1} parent=1 // loop_footer
      %s35 = sadd.s32 1, %s31
    $region7: #{tpu_custom_call.1} parent=1 // loop_footer_branch
      %30 = sbr.rel target = $region3
    $region8: #{tpu_custom_call.1} parent=1 // loop_exit
      _
    %982 = vsyncpa [#allocation3], 1
    %s983 = scalar_lea.sflag [#allocation3], 1
    %984 = vsyncpa %s983, 1
    %985 = vsyncpa [#allocation6], 1
    %s986 = scalar_lea.sflag [#allocation6], 1
    %987 = vsyncpa %s986, 1
    %988 = vsyncpa [#allocation9], 1
    %989 = vsyncpa [#allocation4], 1
    %s990 = scalar_lea.sflag [#allocation4], 1
    %991 = vsyncpa %s990, 1
    %992 = vsyncpa [#allocation13], 1
    %s993 = scalar_lea.sflag [#allocation13], 1
    %994 = vsyncpa %s993, 1

</llo_original>
